<compile_context>
chip_gen: v7x
topology: tpu7x:2x2x1
jax: 0.10.0
libtpu: 0.0.40
codegen_flags: <defaults>
</compile_context>

<pallas_src>
import jax
import jax.numpy as jnp
from jax.experimental import pallas as pl
from jax.experimental.pallas import tpu as pltpu


_LANE = 128

_ACTS = {
    "relu": lambda h: jnp.maximum(h, 0.0),
    "tanh": jnp.tanh,
    "cos": jnp.cos,
    "silu": jax.nn.silu,
    "gelu": lambda h: jax.nn.gelu(h, approximate=False),
    "softplus": jax.nn.softplus,
    "sigmoid": jax.nn.sigmoid,
    "elu": jax.nn.elu,
}
# TODO(synk): RBF1/RBF2 activations use RBFLayer, which is not defined in the spec.


def _round_up(n, m):
    return (n + m - 1) // m * m


def _vmem_budget():
    """Generation-aware (working-set budget, vmem_limit_bytes)."""
    cap = None
    try:
        info = pltpu.get_tpu_info()
        cap = getattr(info, "vmem_capacity_bytes", None)
    except Exception:
        cap = None
    if not cap or cap <= 0:
        cap = 64 * 1024 * 1024            # conservative fallback (v7x-sized)
    if cap >= 100 * 1024 * 1024:          # v5e / v6e: 128 MiB physical VMEM
        return 64 * 1024 * 1024, 96 * 1024 * 1024
    else:                                 # v7x: 64 MiB physical VMEM
        return 36 * 1024 * 1024, 48 * 1024 * 1024


def _choose_tiles(B, D, H, x_dtype, w_dtype, budget, tile_b, tile_k, tile_h):
    x_isz = jnp.dtype(x_dtype).itemsize
    w_isz = jnp.dtype(w_dtype).itemsize
    sub = max(8, 32 // x_isz)             # min sublane multiple for x / out blocks

    def ws(tb, tk, th):
        return (2 * tb * tk * x_isz       # x blocks (double-buffered)
                + 2 * tk * th * w_isz     # weight blocks (double-buffered)
                + 2 * th * 4              # v row blocks
                + 2 * tb * 4              # output blocks
                + tb * th * 4             # f32 pre-activation accumulator
                + tb * 4)                 # f32 y accumulator

    user_b = tile_b is not None
    user_k = tile_k is not None
    user_h = tile_h is not None

    tb = 512 if tile_b is None else tile_b
    tb = B if tb >= B else _round_up(tb, sub)
    tk = D if tile_k is None else min(tile_k, D)
    th = H if tile_h is None else min(tile_h, H)

    # Greedy shrink (K first, then H, then batch) until working set fits budget.
    while ws(tb, tk, th) > budget:
        if not user_k and tk > 2048:
            tk = max(_LANE, _round_up(tk // 2, _LANE))
        elif not user_h and th > 2048:
            th = max(_LANE, _round_up(th // 2, _LANE))
        elif not user_k and tk > _LANE:
            tk = max(_LANE, _round_up(tk // 2, _LANE))
        elif not user_h and th > _LANE:
            th = max(_LANE, _round_up(th // 2, _LANE))
        elif not user_b and tb > sub:
            tb = max(sub, _round_up(tb // 2, sub))
        else:
            break                         # honor explicit user tiles

    # --- K axis legality: multiple of 128 or full D; prefer divisors of D ----
    pad_d = False
    if tk >= D:
        tk = D
    else:
        tk = _round_up(tk, _LANE)
        if tk >= D:
            tk = D
        elif D % tk != 0:
            div = next((t for t in range(tk, 0, -_LANE) if D % t == 0), None)
            if div is not None:
                tk = div                  # lane-aligned divisor: no padding
            else:
                pad_d = True              # fallback: zero-pad D

    # --- H axis legality: multiple of 128 or full H ---------------------------
    pad_h = False
    if th >= H:
        th = H
    else:
        th = _round_up(th, _LANE)
        if th >= H:
            th = H
        elif H % th != 0:
            div = next((t for t in range(th, 0, -_LANE) if H % t == 0), None)
            if div is not None:
                th = div
            else:
                pad_h = True              # fallback: zero-pad weight/v along H

    # --- grow tile_b to cut nb-fold weight re-streaming (keep >= 2 tiles) ----
    if not user_b and tb < B:
        while True:
            if -(-B // tb) <= 2:
                break
            new_tb = _round_up(tb * 2, sub)
            if new_tb >= B or -(-B // new_tb) < 2 or ws(new_tb, tk, th) > budget:
                break
            tb = new_tb

    return tb, tk, th, pad_d, pad_h


def _make_kernel(act, cast_x_to):
    def kernel(x_ref, w_ref, v_ref, o_ref, acc_ref, y_ref):
        j = pl.program_id(1)              # H tile
        k = pl.program_id(2)              # K (reduction) tile
        nh = pl.num_programs(1)
        nk = pl.num_programs(2)

        @pl.when(k == 0)
        def _zero_acc():
            acc_ref[...] = jnp.zeros_like(acc_ref)

        @pl.when(jnp.logical_and(j == 0, k == 0))
        def _zero_y():
            y_ref[...] = jnp.zeros_like(y_ref)

        x_val = x_ref[...]
        if cast_x_to is not None:
            x_val = x_val.astype(cast_x_to)   # bf16 x bf16 MXU path, f32 accum
        acc_ref[...] += jnp.dot(x_val, w_ref[...],
                                preferred_element_type=jnp.float32)

        @pl.when(k == nk - 1)
        def _reduce_h_tile():
            # Activation only after the FULL K reduction (elementwise -> valid
            # per H-tile); degenerate H->1 matmul on VPU + lane reduction.
            h = act(acc_ref[...])                               # (TB, TH) f32
            v_row = v_ref[...].astype(jnp.float32)              # (1, TH)
            y_ref[...] += jnp.sum(h * v_row, axis=-1, keepdims=True)

        @pl.when(jnp.logical_and(j == nh - 1, k == nk - 1))
        def _write_out():
            o_ref[...] = y_ref[...].astype(o_ref.dtype)

    return kernel


def rfmlp_forward(x, weight, v, actfunc="relu",
                  tile_b=None, tile_k=None, tile_h=None):
    """Pallas RFMLP forward.

    x:      (B, ...)  any trailing shape; flattened to (B, input_dim)
    weight: (input_dim, hidden_dim)   -- f32 or bf16
    v:      (hidden_dim,)             -- output_dim == 1 case
    returns (B,) float32
    """
    B = x.shape[0]
    x_flat = x.reshape(B, -1)             # metadata-only on contiguous input
    D, H = weight.shape
    assert x_flat.shape[1] == D
    if v.ndim != 1:
        # TODO(synk): output_dim > 1 (2-D v) needs a real second matmul; only
        # the module's default output_dim == 1 path is implemented here.
        raise NotImplementedError("only output_dim == 1 (1-D v) is supported")
    act = _ACTS[actfunc]

    budget, vmem_limit = _vmem_budget()
    tb, tk, th, pad_d, pad_h = _choose_tiles(
        B, D, H, x_flat.dtype, weight.dtype, budget, tile_b, tile_k, tile_h)

    w = weight
    v_row = v.reshape(1, H)
    if pad_d:                             # last-resort fallback only
        D_pad = _round_up(D, tk)
        x_flat = jnp.pad(x_flat, ((0, 0), (0, D_pad - D)))
        w = jnp.pad(w, ((0, D_pad - D), (0, 0)))
        D = D_pad
    if pad_h:                             # zero-pad columns -> contribute 0 to y
        H_pad = _round_up(H, th)
        w = jnp.pad(w, ((0, 0), (0, H_pad - H)))
        v_row = jnp.pad(v_row, ((0, 0), (0, H_pad - H)))
        H = H_pad

    cast_x_to = None
    if (jnp.dtype(w.dtype) == jnp.dtype(jnp.bfloat16)
            and jnp.dtype(x_flat.dtype) != jnp.dtype(jnp.bfloat16)):
        cast_x_to = jnp.bfloat16          # avoid the slow mixed/promoted MXU path

    nb = pl.cdiv(B, tb)                   # no batch padding: partial last block,
    nh = H // th                          # OOB writes are dropped
    nk = D // tk

    out = pl.pallas_call(
        _make_kernel(act, cast_x_to),
        out_shape=jax.ShapeDtypeStruct((B, 1), jnp.float32),
        grid_spec=pltpu.PrefetchScalarGridSpec(
            num_scalar_prefetch=0,
            grid=(nb, nh, nk),                                  # reduction last
            in_specs=[
                pl.BlockSpec((tb, tk), lambda i, j, k: (i, k)),  # x tile
                pl.BlockSpec((tk, th), lambda i, j, k: (k, j)),  # weight tile
                pl.BlockSpec((1, th), lambda i, j, k: (0, j)),   # v slice
            ],
            out_specs=pl.BlockSpec((tb, 1), lambda i, j, k: (i, 0)),
            scratch_shapes=[pltpu.VMEM((tb, th), jnp.float32),   # pre-act accum
                            pltpu.VMEM((tb, 1), jnp.float32)],   # y accum
        ),
        compiler_params=pltpu.CompilerParams(
            dimension_semantics=("parallel", "arbitrary", "arbitrary"),
            vmem_limit_bytes=vmem_limit),
    )(x_flat, w, v_row)
    return out[:, 0]                      # (B,), matches torch.matmul(h, 1-D v)


def rfmlp_reference(x, weight, v, actfunc="relu"):
    B = x.shape[0]
    xf = x.reshape(B, -1).astype(jnp.float32)
    wf = weight.astype(jnp.float32)
    h = _ACTS[actfunc](xf @ wf)
    return h @ v.astype(jnp.float32)


if __name__ == "__main__":
    key = jax.random.PRNGKey(0)
    k_x, k_w, k_v, k_x2, k_w2, k_v2, k_x4, k_w4, k_v4 = jax.random.split(key, 9)

    # --- Case 1: module-like shapes, f32 (x: (2, 4, 16, 16) -> input_dim=1024) ---
    batch, chans, spatial, hidden = 2, 4, 16, 32
    input_dim = chans * spatial * spatial
    x = jax.random.normal(k_x, (batch, chans, spatial, spatial), dtype=jnp.float32)
    weight = jax.random.normal(k_w, (input_dim, hidden), dtype=jnp.float32)
    v = jax.random.normal(k_v, (hidden,), dtype=jnp.float32) / jnp.sqrt(
        jnp.float32(hidden))

    y1 = rfmlp_forward(x, weight, v)
    jax.block_until_ready(y1)
    y1_ref = rfmlp_reference(x, weight, v)
    assert y1.shape == (batch,)
    assert jnp.allclose(y1, y1_ref, atol=1e-3, rtol=1e-4), (y1, y1_ref)

    # --- Case 2: batch tiling (unpadded partial last block) + K accumulation ---
    B2, D2, H2 = 20, 256, 64
    x2 = jax.random.normal(k_x2, (B2, D2), dtype=jnp.float32)
    w2 = jax.random.normal(k_w2, (D2, H2), dtype=jnp.float32)
    v2 = jax.random.normal(k_v2, (H2,), dtype=jnp.float32) / jnp.sqrt(jnp.float32(H2))

    y2 = rfmlp_forward(x2, w2, v2, tile_b=8, tile_k=128)   # grid (3, 1, 2)
    y2_ref = rfmlp_reference(x2, w2, v2)
    assert y2.shape == (B2,)
    assert jnp.allclose(y2, y2_ref, atol=1e-3, rtol=1e-4), (y2, y2_ref)

    # --- Case 3: bf16 x / weight feeding the MXU (f32 accumulation) ---
    x2_bf = x2.astype(jnp.bfloat16)
    w2_bf = w2.astype(jnp.bfloat16)
    y3 = rfmlp_forward(x2_bf, w2_bf, v2, tile_b=16, tile_k=128)
    y3_ref = rfmlp_reference(x2_bf, w2_bf, v2)
    assert y3.shape == (B2,)
    assert jnp.allclose(y3, y3_ref, atol=5e-2, rtol=5e-3), (y3, y3_ref)

    # --- Case 4: H-tiling path (nh > 1) with tanh activation ---
    B4, D4, H4 = 16, 256, 256
    x4 = jax.random.normal(k_x4, (B4, D4), dtype=jnp.float32)
    w4 = jax.random.normal(k_w4, (D4, H4), dtype=jnp.float32)
    v4 = jax.random.normal(k_v4, (H4,), dtype=jnp.float32) / jnp.sqrt(jnp.float32(H4))
    y4 = rfmlp_forward(x4, w4, v4, actfunc="tanh",
                       tile_b=8, tile_k=128, tile_h=128)    # grid (2, 2, 2)
    y4_ref = rfmlp_reference(x4, w4, v4, actfunc="tanh")
    assert y4.shape == (B4,)
    assert jnp.allclose(y4, y4_ref, atol=1e-3, rtol=1e-4), (y4, y4_ref)

    # --- Case 5: mixed dtypes (f32 x, bf16 weight) -> in-kernel bf16 cast ---
    y5 = rfmlp_forward(x2, w2_bf, v2, tile_b=8, tile_k=128)
    y5_ref = rfmlp_reference(x2.astype(jnp.bfloat16), w2_bf, v2)
    assert y5.shape == (B2,)
    assert jnp.allclose(y5, y5_ref, atol=5e-2, rtol=5e-3), (y5, y5_ref)

    print("KERNEL_OK")
</pallas_src>

<mosaic_0001>
module attributes {stable_mosaic.version = 11 : i64} {
  func.func @kernel(%arg0: i32, %arg1: i32, %arg2: i32, %arg3: memref<2x1024xf32, #tpu.memory_space<vmem>>, %arg4: memref<1024x32xf32, #tpu.memory_space<vmem>>, %arg5: memref<1x32xf32, #tpu.memory_space<vmem>>, %arg6: memref<2x1xf32, #tpu.memory_space<vmem>>, %arg7: memref<2x32xf32, #tpu.memory_space<vmem>>, %arg8: memref<2x1xf32, #tpu.memory_space<vmem>>) attributes {dimension_semantics = [#tpu.dimension_semantics<parallel>, #tpu.dimension_semantics<arbitrary>, #tpu.dimension_semantics<arbitrary>], iteration_bounds = array<i64: 1, 1, 1>, scalar_prefetch = 0 : i64, scratch_operands = 2 : i64, tpu.core_type = #tpu.core_type<tc>, window_params = [{transform_indices = @transform_0, window_bounds = array<i64: 2, 1024>}, {transform_indices = @transform_1, window_bounds = array<i64: 1024, 32>}, {transform_indices = @transform_2, window_bounds = array<i64: 1, 32>}, {transform_indices = @transform_3, window_bounds = array<i64: 2, 1>}]} {
    %c0_i32 = arith.constant 0 : i32
    %0 = arith.cmpi eq, %arg2, %c0_i32 : i32
    %1 = arith.extui %0 : i1 to i32
    %c0_i32_0 = arith.constant 0 : i32
    %2 = arith.cmpi ne, %1, %c0_i32_0 : i32
    scf.if %2 {
      %cst_16 = arith.constant 0.000000e+00 : f32
      %22 = vector.broadcast %cst_16 : f32 to vector<2x32xf32>
      %c0_17 = arith.constant 0 : index
      %c0_18 = arith.constant 0 : index
      %23 = vector.load %arg7[%c0_17, %c0_18] : memref<2x32xf32, #tpu.memory_space<vmem>>, vector<2x32xf32>
      tpu.vector_store %arg7[%c0_17, %c0_18], %22 {strides = array<i32>} : memref<2x32xf32, #tpu.memory_space<vmem>>, vector<2x32xf32>,
    } else {
    }
    %c0_i32_1 = arith.constant 0 : i32
    %3 = arith.cmpi eq, %arg1, %c0_i32_1 : i32
    %c0_i32_2 = arith.constant 0 : i32
    %4 = arith.cmpi eq, %arg2, %c0_i32_2 : i32
    %5 = arith.andi %3, %4 : i1
    %6 = arith.extui %5 : i1 to i32
    %c0_i32_3 = arith.constant 0 : i32
    %7 = arith.cmpi ne, %6, %c0_i32_3 : i32
    scf.if %7 {
      %cst_16 = arith.constant 0.000000e+00 : f32
      %22 = vector.broadcast %cst_16 : f32 to vector<2x1xf32>
      %c0_17 = arith.constant 0 : index
      %c0_18 = arith.constant 0 : index
      %23 = vector.load %arg8[%c0_17, %c0_18] : memref<2x1xf32, #tpu.memory_space<vmem>>, vector<2x1xf32>
      tpu.vector_store %arg8[%c0_17, %c0_18], %22 {strides = array<i32>} : memref<2x1xf32, #tpu.memory_space<vmem>>, vector<2x1xf32>,
    } else {
    }
    %c0 = arith.constant 0 : index
    %c0_4 = arith.constant 0 : index
    %8 = vector.load %arg3[%c0, %c0_4] : memref<2x1024xf32, #tpu.memory_space<vmem>>, vector<2x1024xf32>
    %c0_5 = arith.constant 0 : index
    %c0_6 = arith.constant 0 : index
    %9 = vector.load %arg7[%c0_5, %c0_6] : memref<2x32xf32, #tpu.memory_space<vmem>>, vector<2x32xf32>
    %c0_7 = arith.constant 0 : index
    %c0_8 = arith.constant 0 : index
    %10 = vector.load %arg4[%c0_7, %c0_8] : memref<1024x32xf32, #tpu.memory_space<vmem>>, vector<1024x32xf32>
    %cst = arith.constant dense<0.000000e+00> : vector<2x32xf32>
    %11 = tpu.matmul %8, %10, %cst {dimension_numbers = #tpu.dot_dimension_numbers<[1], [0], [0], [1], [0, 0, 1, 1], [], []>} : vector<2x1024xf32>, vector<1024x32xf32>, vector<2x32xf32> -> vector<2x32xf32>
    %12 = arith.addf %9, %11 : vector<2x32xf32>
    %c0_9 = arith.constant 0 : index
    %c0_10 = arith.constant 0 : index
    %13 = vector.load %arg7[%c0_9, %c0_10] : memref<2x32xf32, #tpu.memory_space<vmem>>, vector<2x32xf32>
    tpu.vector_store %arg7[%c0_9, %c0_10], %12 {strides = array<i32>} : memref<2x32xf32, #tpu.memory_space<vmem>>, vector<2x32xf32>,
    %c0_i32_11 = arith.constant 0 : i32
    %14 = arith.cmpi eq, %arg2, %c0_i32_11 : i32
    %15 = arith.extui %14 : i1 to i32
    %c0_i32_12 = arith.constant 0 : i32
    %16 = arith.cmpi ne, %15, %c0_i32_12 : i32
    scf.if %16 {
      %c0_16 = arith.constant 0 : index
      %c0_17 = arith.constant 0 : index
      %22 = vector.load %arg7[%c0_16, %c0_17] : memref<2x32xf32, #tpu.memory_space<vmem>>, vector<2x32xf32>
      %cst_18 = arith.constant 0.000000e+00 : f32
      %23 = vector.broadcast %cst_18 : f32 to vector<2x32xf32>
      %24 = arith.maximumf %22, %23 : vector<2x32xf32>
      %c0_19 = arith.constant 0 : index
      %c0_20 = arith.constant 0 : index
      %25 = vector.load %arg5[%c0_19, %c0_20] : memref<1x32xf32, #tpu.memory_space<vmem>>, vector<1x32xf32>
      %c0_21 = arith.constant 0 : index
      %c0_22 = arith.constant 0 : index
      %26 = vector.load %arg8[%c0_21, %c0_22] : memref<2x1xf32, #tpu.memory_space<vmem>>, vector<2x1xf32>
      %27 = vector.broadcast %25 : vector<1x32xf32> to vector<2x32xf32>
      %28 = arith.mulf %24, %27 : vector<2x32xf32>
      %cst_23 = arith.constant dense<0.000000e+00> : vector<2xf32>
      %29 = vector.multi_reduction <add>, %28, %cst_23 [1] : vector<2x32xf32> to vector<2xf32>
      %30 = vector.shape_cast %29 : vector<2xf32> to vector<2x1xf32>
      %31 = arith.addf %26, %30 : vector<2x1xf32>
      %c0_24 = arith.constant 0 : index
      %c0_25 = arith.constant 0 : index
      %32 = vector.load %arg8[%c0_24, %c0_25] : memref<2x1xf32, #tpu.memory_space<vmem>>, vector<2x1xf32>
      tpu.vector_store %arg8[%c0_24, %c0_25], %31 {strides = array<i32>} : memref<2x1xf32, #tpu.memory_space<vmem>>, vector<2x1xf32>,
    } else {
    }
    %c0_i32_13 = arith.constant 0 : i32
    %17 = arith.cmpi eq, %arg1, %c0_i32_13 : i32
    %c0_i32_14 = arith.constant 0 : i32
    %18 = arith.cmpi eq, %arg2, %c0_i32_14 : i32
    %19 = arith.andi %17, %18 : i1
    %20 = arith.extui %19 : i1 to i32
    %c0_i32_15 = arith.constant 0 : i32
    %21 = arith.cmpi ne, %20, %c0_i32_15 : i32
    scf.if %21 {
      %c0_16 = arith.constant 0 : index
      %c0_17 = arith.constant 0 : index
      %22 = vector.load %arg8[%c0_16, %c0_17] : memref<2x1xf32, #tpu.memory_space<vmem>>, vector<2x1xf32>
      %c0_18 = arith.constant 0 : index
      %c0_19 = arith.constant 0 : index
      %23 = vector.load %arg6[%c0_18, %c0_19] : memref<2x1xf32, #tpu.memory_space<vmem>>, vector<2x1xf32>
      tpu.vector_store %arg6[%c0_18, %c0_19], %22 {strides = array<i32>} : memref<2x1xf32, #tpu.memory_space<vmem>>, vector<2x1xf32>,
    } else {
    }
    return
  }
  func.func @transform_0(%arg0: i32, %arg1: i32, %arg2: i32) -> (i32, i32) {
    %c0_i32 = arith.constant 0 : i32
    return %arg0, %arg2 : i32, i32
  }
  func.func @transform_1(%arg0: i32, %arg1: i32, %arg2: i32) -> (i32, i32) {
    %c0_i32 = arith.constant 0 : i32
    return %arg2, %arg1 : i32, i32
  }
  func.func @transform_2(%arg0: i32, %arg1: i32, %arg2: i32) -> (i32, i32) {
    %c0_i32 = arith.constant 0 : i32
    %c0_i32_0 = arith.constant 0 : i32
    return %c0_i32, %arg1 : i32, i32
  }
  func.func @transform_3(%arg0: i32, %arg1: i32, %arg2: i32) -> (i32, i32) {
    %c0_i32 = arith.constant 0 : i32
    %c0_i32_0 = arith.constant 0 : i32
    return %arg0, %c0_i32 : i32, i32
  }
}

</mosaic_0001>

<llo_original>
// kernel: tpu_custom_call.1
$region0: #{tpu_custom_call.1}
  #allocation0 [shape = 'u32[]', space=smem, size = 0x4, offset = 0x4, fixed_abs, tag = 'smem constant byte address 0x4 - core index']
  #allocation1 [shape = 'u32[144,128]{1,0:T(1,128)}', space=vmem, size = 0x12000, scoped, tag = 'internal scratch']
  #allocation2 [shape = 'f32[2,32]{1,0:T(2,128)}', space=vmem, size = 0x400, scoped, tag = 'scratch operand']
  #allocation3 [shape = 'f32[2,1]{1,0:T(2,128)}', space=vmem, size = 0x400, scoped, tag = 'scratch operand']
  %s0 = inlined_call_operand.vmem [shape: f32[2,1024], index: 0, kind: input, shape index: {}]
  %s1 = inlined_call_operand.vmem [shape: f32[1024,32], index: 1, kind: input, shape index: {}]
  %s2 = inlined_call_operand.vmem [shape: f32[1,32], index: 2, kind: input, shape index: {}]
  %s3 = inlined_call_operand.vmem [shape: f32[2,1], index: 3, kind: output, shape index: {}]
  %s4 = sld [smem:[#allocation0]]
  $region38: #{tpu_custom_call.1} parent=0
    _
  %s6 = ssub.s32 1, %s4
  %s7 = scalar_select 0, %s6, %s4
  // Predicated region
  $region2: #{tpu_custom_call.1} parent=0 // pred_check
    _
  $region3: #{tpu_custom_call.1} parent=0 // pred_check_branch
    %9 = sbr.rel (0) target = $region5
  $region4: #{tpu_custom_call.1} parent=0 // pred_region
    _
  $region5: #{tpu_custom_call.1} parent=0 // pred_fallthru
    _
  // Predicated region
  $region6: #{tpu_custom_call.1} parent=0 // pred_check
    _
  $region7: #{tpu_custom_call.1} parent=0 // pred_check_branch
    %11 = sbr.rel (0) target = $region9
  $region8: #{tpu_custom_call.1} parent=0 // pred_region
    _
  $region9: #{tpu_custom_call.1} parent=0 // pred_fallthru
    _
  // Predicated region
  $region10: #{tpu_custom_call.1} parent=0 // pred_check
    _
  $region11: #{tpu_custom_call.1} parent=0 // pred_check_branch
    %13 = sbr.rel (0) target = $region13
  $region12: #{tpu_custom_call.1} parent=0 // pred_region
    _
  $region13: #{tpu_custom_call.1} parent=0 // pred_fallthru
    _
  %p14 = scmp.eq.s32.totalorder 0, 0
  // Predicated region
  $region14: #{tpu_custom_call.1} parent=0 // pred_check
    %p15 = pneg %p14
  $region15: #{tpu_custom_call.1} parent=0 // pred_check_branch
    %17 = sbr.rel (%p15) target = $region17
  $region16: #{tpu_custom_call.1} parent=0 // pred_region
    %vm18 = vcmask 254976
    %19 = vst.msk [vmem:[#allocation2] sm:$0x3] %vm18, 0.0
  $region17: #{tpu_custom_call.1} parent=0 // pred_fallthru
    _
  %p20 = scmp.eq.s32.totalorder 0, 0
  %p21 = pnand %p20, %p14
  %p22 = pneg %p21
  // Predicated region
  $region18: #{tpu_custom_call.1} parent=0 // pred_check
    _
  $region19: #{tpu_custom_call.1} parent=0 // pred_check_branch
    %24 = sbr.rel (%p21) target = $region21
  $region20: #{tpu_custom_call.1} parent=0 // pred_region
    %vm25 = vcmask 1024
    %26 = vst.msk [vmem:[#allocation3] sm:$0x3] %vm25, 0.0
  $region21: #{tpu_custom_call.1} parent=0 // pred_fallthru
    _
  %v27 = vld [vmem:[%s0] sm:$0xff]
  %v28 = vld [vmem:[%s0 + $0x8] sm:$0xff]
  %v29 = vld [vmem:[#allocation2] sm:$0x3]
  %v30 = vld [vmem:[%s1] sm:$0xff]
  %v31 = vld [vmem:[%s1 + $0x8] sm:$0xff]
  %v32 = vld [vmem:[%s1 + $0x10] sm:$0xff]
  %v33 = vld [vmem:[%s1 + $0x18] sm:$0xff]
  %v34 = vld [vmem:[%s1 + $0x20] sm:$0xff]
  %v35 = vld [vmem:[%s1 + $0x28] sm:$0xff]
  %v36 = vld [vmem:[%s1 + $0x30] sm:$0xff]
  %v37 = vld [vmem:[%s1 + $0x38] sm:$0xff]
  %v38 = vld [vmem:[%s1 + $0x40] sm:$0xff]
  %v39 = vld [vmem:[%s1 + $0x48] sm:$0xff]
  %v40 = vld [vmem:[%s1 + $0x50] sm:$0xff]
  %v41 = vld [vmem:[%s1 + $0x58] sm:$0xff]
  %v42 = vld [vmem:[%s1 + $0x60] sm:$0xff]
  %v43 = vld [vmem:[%s1 + $0x68] sm:$0xff]
  %v44 = vld [vmem:[%s1 + $0x70] sm:$0xff]
  %v45 = vld [vmem:[%s1 + $0x78] sm:$0xff]
  %v46 = vld [vmem:[%s1 + $0x80] sm:$0xff]
  %v47 = vld [vmem:[%s1 + $0x88] sm:$0xff]
  %v48 = vld [vmem:[%s1 + $0x90] sm:$0xff]
  %v49 = vld [vmem:[%s1 + $0x98] sm:$0xff]
  %v50 = vld [vmem:[%s1 + $0xa0] sm:$0xff]
  %v51 = vld [vmem:[%s1 + $0xa8] sm:$0xff]
  %v52 = vld [vmem:[%s1 + $0xb0] sm:$0xff]
  %v53 = vld [vmem:[%s1 + $0xb8] sm:$0xff]
  %v54 = vld [vmem:[%s1 + $0xc0] sm:$0xff]
  %v55 = vld [vmem:[%s1 + $0xc8] sm:$0xff]
  %v56 = vld [vmem:[%s1 + $0xd0] sm:$0xff]
  %v57 = vld [vmem:[%s1 + $0xd8] sm:$0xff]
  %v58 = vld [vmem:[%s1 + $0xe0] sm:$0xff]
  %v59 = vld [vmem:[%s1 + $0xe8] sm:$0xff]
  %v60 = vld [vmem:[%s1 + $0xf0] sm:$0xff]
  %v61 = vld [vmem:[%s1 + $0xf8] sm:$0xff]
  %v62 = vld [vmem:[%s1 + $0x100] sm:$0xff]
  %v63 = vld [vmem:[%s1 + $0x108] sm:$0xff]
  %v64 = vld [vmem:[%s1 + $0x110] sm:$0xff]
  %v65 = vld [vmem:[%s1 + $0x118] sm:$0xff]
  %v66 = vld [vmem:[%s1 + $0x120] sm:$0xff]
  %v67 = vld [vmem:[%s1 + $0x128] sm:$0xff]
  %v68 = vld [vmem:[%s1 + $0x130] sm:$0xff]
  %v69 = vld [vmem:[%s1 + $0x138] sm:$0xff]
  %v70 = vld [vmem:[%s1 + $0x140] sm:$0xff]
  %v71 = vld [vmem:[%s1 + $0x148] sm:$0xff]
  %v72 = vld [vmem:[%s1 + $0x150] sm:$0xff]
  %v73 = vld [vmem:[%s1 + $0x158] sm:$0xff]
  %v74 = vld [vmem:[%s1 + $0x160] sm:$0xff]
  %v75 = vld [vmem:[%s1 + $0x168] sm:$0xff]
  %v76 = vld [vmem:[%s1 + $0x170] sm:$0xff]
  %v77 = vld [vmem:[%s1 + $0x178] sm:$0xff]
  %v78 = vld [vmem:[%s1 + $0x180] sm:$0xff]
  %v79 = vld [vmem:[%s1 + $0x188] sm:$0xff]
  %v80 = vld [vmem:[%s1 + $0x190] sm:$0xff]
  %v81 = vld [vmem:[%s1 + $0x198] sm:$0xff]
  %v82 = vld [vmem:[%s1 + $0x1a0] sm:$0xff]
  %v83 = vld [vmem:[%s1 + $0x1a8] sm:$0xff]
  %v84 = vld [vmem:[%s1 + $0x1b0] sm:$0xff]
  %v85 = vld [vmem:[%s1 + $0x1b8] sm:$0xff]
  %v86 = vld [vmem:[%s1 + $0x1c0] sm:$0xff]
  %v87 = vld [vmem:[%s1 + $0x1c8] sm:$0xff]
  %v88 = vld [vmem:[%s1 + $0x1d0] sm:$0xff]
  %v89 = vld [vmem:[%s1 + $0x1d8] sm:$0xff]
  %v90 = vld [vmem:[%s1 + $0x1e0] sm:$0xff]
  %v91 = vld [vmem:[%s1 + $0x1e8] sm:$0xff]
  %v92 = vld [vmem:[%s1 + $0x1f0] sm:$0xff]
  %v93 = vld [vmem:[%s1 + $0x1f8] sm:$0xff]
  %v94 = vld [vmem:[%s1 + $0x200] sm:$0xff]
  %v95 = vld [vmem:[%s1 + $0x208] sm:$0xff]
  %v96 = vld [vmem:[%s1 + $0x210] sm:$0xff]
  %v97 = vld [vmem:[%s1 + $0x218] sm:$0xff]
  %v98 = vld [vmem:[%s1 + $0x220] sm:$0xff]
  %v99 = vld [vmem:[%s1 + $0x228] sm:$0xff]
  %v100 = vld [vmem:[%s1 + $0x230] sm:$0xff]
  %v101 = vld [vmem:[%s1 + $0x238] sm:$0xff]
  %v102 = vld [vmem:[%s1 + $0x240] sm:$0xff]
  %v103 = vld [vmem:[%s1 + $0x248] sm:$0xff]
  %v104 = vld [vmem:[%s1 + $0x250] sm:$0xff]
  %v105 = vld [vmem:[%s1 + $0x258] sm:$0xff]
  %v106 = vld [vmem:[%s1 + $0x260] sm:$0xff]
  %v107 = vld [vmem:[%s1 + $0x268] sm:$0xff]
  %v108 = vld [vmem:[%s1 + $0x270] sm:$0xff]
  %v109 = vld [vmem:[%s1 + $0x278] sm:$0xff]
  %v110 = vld [vmem:[%s1 + $0x280] sm:$0xff]
  %v111 = vld [vmem:[%s1 + $0x288] sm:$0xff]
  %v112 = vld [vmem:[%s1 + $0x290] sm:$0xff]
  %v113 = vld [vmem:[%s1 + $0x298] sm:$0xff]
  %v114 = vld [vmem:[%s1 + $0x2a0] sm:$0xff]
  %v115 = vld [vmem:[%s1 + $0x2a8] sm:$0xff]
  %v116 = vld [vmem:[%s1 + $0x2b0] sm:$0xff]
  %v117 = vld [vmem:[%s1 + $0x2b8] sm:$0xff]
  %v118 = vld [vmem:[%s1 + $0x2c0] sm:$0xff]
  %v119 = vld [vmem:[%s1 + $0x2c8] sm:$0xff]
  %v120 = vld [vmem:[%s1 + $0x2d0] sm:$0xff]
  %v121 = vld [vmem:[%s1 + $0x2d8] sm:$0xff]
  %v122 = vld [vmem:[%s1 + $0x2e0] sm:$0xff]
  %v123 = vld [vmem:[%s1 + $0x2e8] sm:$0xff]
  %v124 = vld [vmem:[%s1 + $0x2f0] sm:$0xff]
  %v125 = vld [vmem:[%s1 + $0x2f8] sm:$0xff]
  %v126 = vld [vmem:[%s1 + $0x300] sm:$0xff]
  %v127 = vld [vmem:[%s1 + $0x308] sm:$0xff]
  %v128 = vld [vmem:[%s1 + $0x310] sm:$0xff]
  %v129 = vld [vmem:[%s1 + $0x318] sm:$0xff]
  %v130 = vld [vmem:[%s1 + $0x320] sm:$0xff]
  %v131 = vld [vmem:[%s1 + $0x328] sm:$0xff]
  %v132 = vld [vmem:[%s1 + $0x330] sm:$0xff]
  %v133 = vld [vmem:[%s1 + $0x338] sm:$0xff]
  %v134 = vld [vmem:[%s1 + $0x340] sm:$0xff]
  %v135 = vld [vmem:[%s1 + $0x348] sm:$0xff]
  %v136 = vld [vmem:[%s1 + $0x350] sm:$0xff]
  %v137 = vld [vmem:[%s1 + $0x358] sm:$0xff]
  %v138 = vld [vmem:[%s1 + $0x360] sm:$0xff]
  %v139 = vld [vmem:[%s1 + $0x368] sm:$0xff]
  %v140 = vld [vmem:[%s1 + $0x370] sm:$0xff]
  %v141 = vld [vmem:[%s1 + $0x378] sm:$0xff]
  %v142 = vld [vmem:[%s1 + $0x380] sm:$0xff]
  %v143 = vld [vmem:[%s1 + $0x388] sm:$0xff]
  %v144 = vld [vmem:[%s1 + $0x390] sm:$0xff]
  %v145 = vld [vmem:[%s1 + $0x398] sm:$0xff]
  %v146 = vld [vmem:[%s1 + $0x3a0] sm:$0xff]
  %v147 = vld [vmem:[%s1 + $0x3a8] sm:$0xff]
  %v148 = vld [vmem:[%s1 + $0x3b0] sm:$0xff]
  %v149 = vld [vmem:[%s1 + $0x3b8] sm:$0xff]
  %v150 = vld [vmem:[%s1 + $0x3c0] sm:$0xff]
  %v151 = vld [vmem:[%s1 + $0x3c8] sm:$0xff]
  %v152 = vld [vmem:[%s1 + $0x3d0] sm:$0xff]
  %v153 = vld [vmem:[%s1 + $0x3d8] sm:$0xff]
  %v154 = vld [vmem:[%s1 + $0x3e0] sm:$0xff]
  %v155 = vld [vmem:[%s1 + $0x3e8] sm:$0xff]
  %v156 = vld [vmem:[%s1 + $0x3f0] sm:$0xff]
  %v157 = vld [vmem:[%s1 + $0x3f8] sm:$0xff]
  %v160 = vcombine.high %v27, %v27
  %v162 = vunpack.c.l.s4 1983009808
  %v163 = vunpack.c.0.s8 %v162
  %v164 = vlaneseq
  %v165 = vshrl.u32 %v164, 7
  %v166 = vsub.s32 %v163, %v165
  %v167 = vrot.slane %v27, %v166
  %v169 = vunpack.c.l.s4 1983009808
  %v170 = vunpack.c.0.s8 %v169
  %v171 = vlaneseq
  %v172 = vshrl.u32 %v171, 7
  %v173 = vsub.s32 %v170, %v172
  %v174 = vrot.slane %v160, %v173
  %v175 = vcombine.high %v167, %v167
  %v176 = vcombine.high %v174, %v174
  %v177 = vcombine.high %v28, %v28
  %v179 = vunpack.c.l.s4 1983009808
  %v180 = vunpack.c.0.s8 %v179
  %v181 = vlaneseq
  %v182 = vshrl.u32 %v181, 7
  %v183 = vsub.s32 %v180, %v182
  %v184 = vrot.slane %v28, %v183
  %v186 = vunpack.c.l.s4 1983009808
  %v187 = vunpack.c.0.s8 %v186
  %v188 = vlaneseq
  %v189 = vshrl.u32 %v188, 7
  %v190 = vsub.s32 %v187, %v189
  %v191 = vrot.slane %v177, %v190
  %v192 = vcombine.high %v184, %v184
  %v193 = vcombine.high %v191, %v191
  %202 = vmatprep.subr.mxu0 0.0
  %203 = vmatpush1.msra.mxu0 %v30
  %204 = vmatprep.subr.mxu0 0.0
  %205 = vmatpush1.msra.mxu0 %v31
  %206 = vmatprep.subr.mxu0 0.0
  %207 = vmatpush1.msra.mxu0 %v32
  %208 = vmatprep.subr.mxu0 0.0
  %209 = vmatpush1.msra.mxu0 %v33
  %210 = vmatprep.subr.mxu0 0.0
  %211 = vmatpush1.msra.mxu0 %v34
  %212 = vmatprep.subr.mxu0 0.0
  %213 = vmatpush1.msra.mxu0 %v35
  %214 = vmatprep.subr.mxu0 0.0
  %215 = vmatpush1.msra.mxu0 %v36
  %216 = vmatprep.subr.mxu0 0.0
  %217 = vmatpush1.msra.mxu0 %v37
  %218 = vmatprep.subr.mxu0 0.0
  %219 = vmatpush1.msra.mxu0 %v38
  %220 = vmatprep.subr.mxu0 0.0
  %221 = vmatpush1.msra.mxu0 %v39
  %222 = vmatprep.subr.mxu0 0.0
  %223 = vmatpush1.msra.mxu0 %v40
  %224 = vmatprep.subr.mxu0 0.0
  %225 = vmatpush1.msra.mxu0 %v41
  %226 = vmatprep.subr.mxu0 0.0
  %227 = vmatpush1.msra.mxu0 %v42
  %228 = vmatprep.subr.mxu0 0.0
  %229 = vmatpush1.msra.mxu0 %v43
  %230 = vmatprep.subr.mxu0 0.0
  %231 = vmatpush1.msra.mxu0 %v44
  %232 = vmatprep.subr.mxu0 0.0
  %233 = vmatpush1.msra.mxu0 %v45
  %234 = vmatprep.subr.mxu0 0.0
  %235 = vmatpush1.msra.mxu0 %v46
  %236 = vmatprep.subr.mxu0 0.0
  %237 = vmatpush1.msra.mxu0 %v47
  %238 = vmatprep.subr.mxu0 0.0
  %239 = vmatpush1.msra.mxu0 %v48
  %240 = vmatprep.subr.mxu0 0.0
  %241 = vmatpush1.msra.mxu0 %v49
  %242 = vmatprep.subr.mxu0 0.0
  %243 = vmatpush1.msra.mxu0 %v50
  %244 = vmatprep.subr.mxu0 0.0
  %245 = vmatpush1.msra.mxu0 %v51
  %246 = vmatprep.subr.mxu0 0.0
  %247 = vmatpush1.msra.mxu0 %v52
  %248 = vmatprep.subr.mxu0 0.0
  %249 = vmatpush1.msra.mxu0 %v53
  %250 = vmatprep.subr.mxu0 0.0
  %251 = vmatpush1.msra.mxu0 %v54
  %252 = vmatprep.subr.mxu0 0.0
  %253 = vmatpush1.msra.mxu0 %v55
  %254 = vmatprep.subr.mxu0 0.0
  %255 = vmatpush1.msra.mxu0 %v56
  %256 = vmatprep.subr.mxu0 0.0
  %257 = vmatpush1.msra.mxu0 %v57
  %258 = vmatprep.subr.mxu0 0.0
  %259 = vmatpush1.msra.mxu0 %v58
  %260 = vmatprep.subr.mxu0 0.0
  %261 = vmatpush1.msra.mxu0 %v59
  %262 = vmatprep.subr.mxu0 0.0
  %263 = vmatpush1.msra.mxu0 %v60
  %264 = vmatprep.subr.mxu0 0.0
  %265 = vmatpush1.msra.mxu0 %v61
  %266 = vmatprep.mubr.f32.mxu0 %v175
  %267 = vmatmul.mubr.f32.gmra.mrb[0].mxu0 %v167
  %v268 = vpop.f32.mrb[0].mxu0
  %v269 = vadd.f32 0.0, %v268
  %v270 = vpop.f32.mrb[0].mxu0
  %271 = vdwg.mxu0
  %272 = vmatprep.subr.mxu0 0.0
  %273 = vmatpush1.msra.mxu0 %v62
  %274 = vmatprep.subr.mxu0 0.0
  %275 = vmatpush1.msra.mxu0 %v63
  %276 = vmatprep.subr.mxu0 0.0
  %277 = vmatpush1.msra.mxu0 %v64
  %278 = vmatprep.subr.mxu0 0.0
  %279 = vmatpush1.msra.mxu0 %v65
  %280 = vmatprep.subr.mxu0 0.0
  %281 = vmatpush1.msra.mxu0 %v66
  %282 = vmatprep.subr.mxu0 0.0
  %283 = vmatpush1.msra.mxu0 %v67
  %284 = vmatprep.subr.mxu0 0.0
  %285 = vmatpush1.msra.mxu0 %v68
  %286 = vmatprep.subr.mxu0 0.0
  %287 = vmatpush1.msra.mxu0 %v69
  %288 = vmatprep.subr.mxu0 0.0
  %289 = vmatpush1.msra.mxu0 %v70
  %290 = vmatprep.subr.mxu0 0.0
  %291 = vmatpush1.msra.mxu0 %v71
  %292 = vmatprep.subr.mxu0 0.0
  %293 = vmatpush1.msra.mxu0 %v72
  %294 = vmatprep.subr.mxu0 0.0
  %295 = vmatpush1.msra.mxu0 %v73
  %296 = vmatprep.subr.mxu0 0.0
  %297 = vmatpush1.msra.mxu0 %v74
  %298 = vmatprep.subr.mxu0 0.0
  %299 = vmatpush1.msra.mxu0 %v75
  %300 = vmatprep.subr.mxu0 0.0
  %301 = vmatpush1.msra.mxu0 %v76
  %302 = vmatprep.subr.mxu0 0.0
  %303 = vmatpush1.msra.mxu0 %v77
  %304 = vmatprep.subr.mxu0 0.0
  %305 = vmatpush1.msra.mxu0 %v78
  %306 = vmatprep.subr.mxu0 0.0
  %307 = vmatpush1.msra.mxu0 %v79
  %308 = vmatprep.subr.mxu0 0.0
  %309 = vmatpush1.msra.mxu0 %v80
  %310 = vmatprep.subr.mxu0 0.0
  %311 = vmatpush1.msra.mxu0 %v81
  %312 = vmatprep.subr.mxu0 0.0
  %313 = vmatpush1.msra.mxu0 %v82
  %314 = vmatprep.subr.mxu0 0.0
  %315 = vmatpush1.msra.mxu0 %v83
  %316 = vmatprep.subr.mxu0 0.0
  %317 = vmatpush1.msra.mxu0 %v84
  %318 = vmatprep.subr.mxu0 0.0
  %319 = vmatpush1.msra.mxu0 %v85
  %320 = vmatprep.subr.mxu0 0.0
  %321 = vmatpush1.msra.mxu0 %v86
  %322 = vmatprep.subr.mxu0 0.0
  %323 = vmatpush1.msra.mxu0 %v87
  %324 = vmatprep.subr.mxu0 0.0
  %325 = vmatpush1.msra.mxu0 %v88
  %326 = vmatprep.subr.mxu0 0.0
  %327 = vmatpush1.msra.mxu0 %v89
  %328 = vmatprep.subr.mxu0 0.0
  %329 = vmatpush1.msra.mxu0 %v90
  %330 = vmatprep.subr.mxu0 0.0
  %331 = vmatpush1.msra.mxu0 %v91
  %332 = vmatprep.subr.mxu0 0.0
  %333 = vmatpush1.msra.mxu0 %v92
  %334 = vmatprep.subr.mxu0 0.0
  %335 = vmatpush1.msra.mxu0 %v93
  %336 = vmatprep.mubr.f32.mxu0 %v176
  %337 = vmatmul.mubr.f32.gmra.mrb[0].mxu0 %v174
  %v338 = vpop.f32.mrb[0].mxu0
  %v339 = vadd.f32 %v269, %v338
  %v340 = vpop.f32.mrb[0].mxu0
  %341 = vdwg.mxu0
  %342 = vmatprep.subr.mxu0 0.0
  %343 = vmatpush1.msra.mxu0 %v94
  %344 = vmatprep.subr.mxu0 0.0
  %345 = vmatpush1.msra.mxu0 %v95
  %346 = vmatprep.subr.mxu0 0.0
  %347 = vmatpush1.msra.mxu0 %v96
  %348 = vmatprep.subr.mxu0 0.0
  %349 = vmatpush1.msra.mxu0 %v97
  %350 = vmatprep.subr.mxu0 0.0
  %351 = vmatpush1.msra.mxu0 %v98
  %352 = vmatprep.subr.mxu0 0.0
  %353 = vmatpush1.msra.mxu0 %v99
  %354 = vmatprep.subr.mxu0 0.0
  %355 = vmatpush1.msra.mxu0 %v100
  %356 = vmatprep.subr.mxu0 0.0
  %357 = vmatpush1.msra.mxu0 %v101
  %358 = vmatprep.subr.mxu0 0.0
  %359 = vmatpush1.msra.mxu0 %v102
  %360 = vmatprep.subr.mxu0 0.0
  %361 = vmatpush1.msra.mxu0 %v103
  %362 = vmatprep.subr.mxu0 0.0
  %363 = vmatpush1.msra.mxu0 %v104
  %364 = vmatprep.subr.mxu0 0.0
  %365 = vmatpush1.msra.mxu0 %v105
  %366 = vmatprep.subr.mxu0 0.0
  %367 = vmatpush1.msra.mxu0 %v106
  %368 = vmatprep.subr.mxu0 0.0
  %369 = vmatpush1.msra.mxu0 %v107
  %370 = vmatprep.subr.mxu0 0.0
  %371 = vmatpush1.msra.mxu0 %v108
  %372 = vmatprep.subr.mxu0 0.0
  %373 = vmatpush1.msra.mxu0 %v109
  %374 = vmatprep.subr.mxu0 0.0
  %375 = vmatpush1.msra.mxu0 %v110
  %376 = vmatprep.subr.mxu0 0.0
  %377 = vmatpush1.msra.mxu0 %v111
  %378 = vmatprep.subr.mxu0 0.0
  %379 = vmatpush1.msra.mxu0 %v112
  %380 = vmatprep.subr.mxu0 0.0
  %381 = vmatpush1.msra.mxu0 %v113
  %382 = vmatprep.subr.mxu0 0.0
  %383 = vmatpush1.msra.mxu0 %v114
  %384 = vmatprep.subr.mxu0 0.0
  %385 = vmatpush1.msra.mxu0 %v115
  %386 = vmatprep.subr.mxu0 0.0
  %387 = vmatpush1.msra.mxu0 %v116
  %388 = vmatprep.subr.mxu0 0.0
  %389 = vmatpush1.msra.mxu0 %v117
  %390 = vmatprep.subr.mxu0 0.0
  %391 = vmatpush1.msra.mxu0 %v118
  %392 = vmatprep.subr.mxu0 0.0
  %393 = vmatpush1.msra.mxu0 %v119
  %394 = vmatprep.subr.mxu0 0.0
  %395 = vmatpush1.msra.mxu0 %v120
  %396 = vmatprep.subr.mxu0 0.0
  %397 = vmatpush1.msra.mxu0 %v121
  %398 = vmatprep.subr.mxu0 0.0
  %399 = vmatpush1.msra.mxu0 %v122
  %400 = vmatprep.subr.mxu0 0.0
  %401 = vmatpush1.msra.mxu0 %v123
  %402 = vmatprep.subr.mxu0 0.0
  %403 = vmatpush1.msra.mxu0 %v124
  %404 = vmatprep.subr.mxu0 0.0
  %405 = vmatpush1.msra.mxu0 %v125
  %406 = vmatprep.mubr.f32.mxu0 %v192
  %407 = vmatmul.mubr.f32.gmra.mrb[0].mxu0 %v184
  %v408 = vpop.f32.mrb[0].mxu0
  %v409 = vadd.f32 %v339, %v408
  %v410 = vpop.f32.mrb[0].mxu0
  %411 = vdwg.mxu0
  %412 = vmatprep.subr.mxu0 0.0
  %413 = vmatpush1.msra.mxu0 %v126
  %414 = vmatprep.subr.mxu0 0.0
  %415 = vmatpush1.msra.mxu0 %v127
  %416 = vmatprep.subr.mxu0 0.0
  %417 = vmatpush1.msra.mxu0 %v128
  %418 = vmatprep.subr.mxu0 0.0
  %419 = vmatpush1.msra.mxu0 %v129
  %420 = vmatprep.subr.mxu0 0.0
  %421 = vmatpush1.msra.mxu0 %v130
  %422 = vmatprep.subr.mxu0 0.0
  %423 = vmatpush1.msra.mxu0 %v131
  %424 = vmatprep.subr.mxu0 0.0
  %425 = vmatpush1.msra.mxu0 %v132
  %426 = vmatprep.subr.mxu0 0.0
  %427 = vmatpush1.msra.mxu0 %v133
  %428 = vmatprep.subr.mxu0 0.0
  %429 = vmatpush1.msra.mxu0 %v134
  %430 = vmatprep.subr.mxu0 0.0
  %431 = vmatpush1.msra.mxu0 %v135
  %432 = vmatprep.subr.mxu0 0.0
  %433 = vmatpush1.msra.mxu0 %v136
  %434 = vmatprep.subr.mxu0 0.0
  %435 = vmatpush1.msra.mxu0 %v137
  %436 = vmatprep.subr.mxu0 0.0
  %437 = vmatpush1.msra.mxu0 %v138
  %438 = vmatprep.subr.mxu0 0.0
  %439 = vmatpush1.msra.mxu0 %v139
  %440 = vmatprep.subr.mxu0 0.0
  %441 = vmatpush1.msra.mxu0 %v140
  %442 = vmatprep.subr.mxu0 0.0
  %443 = vmatpush1.msra.mxu0 %v141
  %444 = vmatprep.subr.mxu0 0.0
  %445 = vmatpush1.msra.mxu0 %v142
  %446 = vmatprep.subr.mxu0 0.0
  %447 = vmatpush1.msra.mxu0 %v143
  %448 = vmatprep.subr.mxu0 0.0
  %449 = vmatpush1.msra.mxu0 %v144
  %450 = vmatprep.subr.mxu0 0.0
  %451 = vmatpush1.msra.mxu0 %v145
  %452 = vmatprep.subr.mxu0 0.0
  %453 = vmatpush1.msra.mxu0 %v146
  %454 = vmatprep.subr.mxu0 0.0
  %455 = vmatpush1.msra.mxu0 %v147
  %456 = vmatprep.subr.mxu0 0.0
  %457 = vmatpush1.msra.mxu0 %v148
  %458 = vmatprep.subr.mxu0 0.0
  %459 = vmatpush1.msra.mxu0 %v149
  %460 = vmatprep.subr.mxu0 0.0
  %461 = vmatpush1.msra.mxu0 %v150
  %462 = vmatprep.subr.mxu0 0.0
  %463 = vmatpush1.msra.mxu0 %v151
  %464 = vmatprep.subr.mxu0 0.0
  %465 = vmatpush1.msra.mxu0 %v152
  %466 = vmatprep.subr.mxu0 0.0
  %467 = vmatpush1.msra.mxu0 %v153
  %468 = vmatprep.subr.mxu0 0.0
  %469 = vmatpush1.msra.mxu0 %v154
  %470 = vmatprep.subr.mxu0 0.0
  %471 = vmatpush1.msra.mxu0 %v155
  %472 = vmatprep.subr.mxu0 0.0
  %473 = vmatpush1.msra.mxu0 %v156
  %474 = vmatprep.subr.mxu0 0.0
  %475 = vmatpush1.msra.mxu0 %v157
  %476 = vmatprep.mubr.f32.mxu0 %v193
  %477 = vmatmul.mubr.f32.gmra.mrb[0].mxu0 %v191
  %v478 = vpop.f32.mrb[0].mxu0
  %v479 = vadd.f32 %v409, %v478
  %v480 = vpop.f32.mrb[0].mxu0
  %481 = vdwg.mxu0
  %v482 = vadd.f32 %v29, %v479
  %vm483 = vcmask 254976
  %484 = vst.msk [vmem:[#allocation2] sm:$0x3] %vm483, %v482
  // Predicated region
  $region22: #{tpu_custom_call.1} parent=0 // pred_check
    %p485 = pneg %p14
  $region23: #{tpu_custom_call.1} parent=0 // pred_check_branch
    %487 = sbr.rel (%p485) target = $region25
  $region24: #{tpu_custom_call.1} parent=0 // pred_region
    %v488 = vld [vmem:[#allocation2] sm:$0x3]
    %v489 = vmax.f32 %v488, 0.0
    %v490 = vld [vmem:[%s2] sm:$0x1]
    %v491 = vld [vmem:[#allocation3] sm:$0x3]
    %v493 = vlaneseq
    %v494 = vshrl.u32 %v493, 7
    %v495 = vsub.s32 0, %v494
    %v496 = vrot.slane %v490, %v495
    %v498 = vmul.f32 %v489, %v496
    %v499 = vsel %vm483, %v498, 0.0
    %500 = vadd.xlane.f32.xlu0 %v499
    %v501 = vpop.xlane.xlu0 %500
    %v502 = vadd.f32 %v491, %v501
    %vm503 = vcmask 1024
    %504 = vst.msk [vmem:[#allocation3] sm:$0x3] %vm503, %v502
  $region25: #{tpu_custom_call.1} parent=0 // pred_fallthru
    _
  // Predicated region
  $region26: #{tpu_custom_call.1} parent=0 // pred_check
    _
  $region27: #{tpu_custom_call.1} parent=0 // pred_check_branch
    %506 = sbr.rel (%p21) target = $region29
  $region28: #{tpu_custom_call.1} parent=0 // pred_region
    %v507 = vld [vmem:[#allocation3] sm:$0x3]
    %vm508 = vcmask 1024
    %509 = vst.msk [vmem:[%s3] sm:$0x3] %vm508, %v507
  $region29: #{tpu_custom_call.1} parent=0 // pred_fallthru
    _
  // Predicated region
  $region30: #{tpu_custom_call.1} parent=0 // pred_check
    _
  $region31: #{tpu_custom_call.1} parent=0 // pred_check_branch
    %511 = sbr.rel (0) target = $region33
  $region32: #{tpu_custom_call.1} parent=0 // pred_region
    _
  $region33: #{tpu_custom_call.1} parent=0 // pred_fallthru
    _
  // Predicated region
  $region34: #{tpu_custom_call.1} parent=0 // pred_check
    _
  $region35: #{tpu_custom_call.1} parent=0 // pred_check_branch
    %513 = sbr.rel (0) target = $region37
  $region36: #{tpu_custom_call.1} parent=0 // pred_region
    _
  $region37: #{tpu_custom_call.1} parent=0 // pred_fallthru
    _

</llo_original>
